<compile_context>
chip_gen: v7x
topology: tpu7x:2x2x1
jax: 0.10.0
libtpu: 0.0.40
codegen_flags: <defaults>
</compile_context>

<pallas_src>
import jax
import jax.numpy as jnp
from jax.experimental import pallas as pl
from jax.experimental.pallas import tpu as pltpu


# ------------------------------ fused Pallas kernel ------------------------------

def _make_conditioner_kernel(N, T, W, bins, res_scale, eps, has_xcond):
    R = (N * T) // 2          # paired rows: row r covers flat time steps 2r, 2r+1
    Tp = T // 2               # pairs per sequence
    C2 = 2 * W                # paired channel width
    KD = 4 * W                # halo-slab contraction width (=128 for W=32)

    def kernel(*refs):
        if has_xcond:
            tok_ref, w_ref, vec_ref, xc_ref, o_ref = refs
        else:
            tok_ref, w_ref, vec_ref, o_ref = refs

        f32 = jnp.float32
        bf16 = jnp.bfloat16

        # ---- packed per-channel vectors: ONE (8,128) DMA, static slices --------
        vec = vec_ref[...]                                   # (8, 128) f32
        b_in = vec[0:1, 0:C2]
        b_r1 = vec[1:2, 0:C2]
        b_r2 = vec[2:3, 0:C2]
        b_t4 = vec[3:4, 0:KD]
        g = vec[4:5, 0:W]
        beta = vec[5:6, 0:W]

        # ---- Embedding: paired one-hot (R,128) @ block-diag emb (128, 2W) ------
        # (Out-of-range token ids map to the zero row rather than erroring.)
        tok = tok_ref[...]                                   # (R, 2) int32
        lane = jax.lax.broadcasted_iota(jnp.int32, (R, 128), 1)
        tgt = jnp.where(lane < bins, tok[:, 0:1], tok[:, 1:2] + bins)
        onehot = (lane == tgt).astype(f32).astype(bf16)       # exact 0/1 in bf16
        x = jnp.dot(onehot, w_ref[0][:, 0:C2],
                    preferred_element_type=f32)              # (R, 2W) f32
        if has_xcond:
            x = x + xc_ref[...]

        # ---- batch-aware halos via pltpu.roll + boundary masks (no MXU) --------
        row = jax.lax.broadcasted_iota(jnp.int32, (R, 1), 0)
        at_seq_start = (row % Tp) == 0                        # step 2r is seq start
        at_seq_end = (row % Tp) == (Tp - 1)                   # step 2r+1 is seq end

        def halo_slab(v):
            # v: (R, 2W) f32, row r = [x(2r) | x(2r+1)]
            prev = pltpu.roll(v, 1, 0)                        # prev[r] = v[r-1]
            nxt = pltpu.roll(v, R - 1, 0)                     # nxt[r]  = v[r+1]
            left = jnp.where(at_seq_start, 0.0, prev[:, W:C2])   # x(2r-1)
            right = jnp.where(at_seq_end, 0.0, nxt[:, 0:W])      # x(2r+2)
            # [x(2r-1) | x(2r) | x(2r+1) | x(2r+2)]  ->  (R, 4W) bf16
            return jnp.concatenate([left, v, right], axis=-1).astype(bf16)

        def conv3(v, w_idx, b):
            # Conv1d(k=3, s=1, p=1), both time phases in one (R,4W)@(4W,2W) dot.
            return jnp.dot(halo_slab(v), w_ref[w_idx][0:KD, 0:C2],
                           preferred_element_type=f32) + b

        # ---- Conv1d(W, W, 3, 1, 1) ---------------------------------------------
        h = conv3(x, 1, b_in)

        # ---- Resnet1D(depth=1): h + res_scale * Conv1x1(ReLU(Conv3(ReLU(h)))) --
        t1 = conv3(jnp.maximum(h, 0.0), 2, b_r1)
        t2 = jnp.dot(jnp.maximum(t1, 0.0).astype(bf16), w_ref[3][0:C2, 0:C2],
                     preferred_element_type=f32) + b_r2
        if res_scale != 1.0:                                  # static skip at 1.0
            t2 = f32(res_scale) * t2
        h = h + t2

        # ---- ConvTranspose1d(W, W, 4, stride 2, pad 1): single paired dot ------
        #   y[2t]   = h[t-1] @ Wt[:,:,3] + h[t]   @ Wt[:,:,1] + b
        #   y[2t+1] = h[t]   @ Wt[:,:,2] + h[t+1] @ Wt[:,:,0] + b
        # -> (R, 4W=128) rows [even(2r) | odd(2r) | even(2r+1) | odd(2r+1)]
        y = jnp.dot(halo_slab(h), w_ref[4][0:KD, 0:KD],
                    preferred_element_type=f32) + b_t4

        # ---- LayerNorm over W: once, over the 4 vertically stacked phases ------
        z = jnp.concatenate([y[:, 0:W], y[:, W:2 * W],
                             y[:, 2 * W:3 * W], y[:, 3 * W:4 * W]], axis=0)
        mean = jnp.mean(z, axis=-1, keepdims=True)
        zc = z - mean
        var = jnp.mean(zc * zc, axis=-1, keepdims=True)
        zn = zc * jax.lax.rsqrt(var + eps) * g + beta          # (4R, W) f32

        # ---- single lane-dense (R,128) store; wrapper reshape is free ----------
        o_ref[...] = jnp.concatenate(
            [zn[0:R], zn[R:2 * R], zn[2 * R:3 * R], zn[3 * R:4 * R]], axis=-1)

    return kernel


# ----------------------------- Conditioner forward --------------------------------

def conditioner_forward(tokens, p, x_cond=None, *, stride_t=2, res_scale=1.0, eps=1e-5):
    if stride_t != 2:
        raise NotImplementedError("fused kernel specialized to down_t=1, stride_t=2")
    N, T = tokens.shape
    bins, W = p["emb"].shape
    if T % 2 != 0:
        raise NotImplementedError("paired-row layout requires even T")
    if 2 * bins > 128 or 4 * W > 128:
        # TODO(synk): large-bins path should use a scalar-prefetched gather.
        raise NotImplementedError("packed-slab kernel sized for 2*bins<=128, 4*W<=128")

    R, C2, KD = (N * T) // 2, 2 * W, 4 * W
    f32 = jnp.float32

    def tap(wt, k):            # PyTorch Conv1d weight (Cout, Cin, K) -> (Cin, Cout)
        return jnp.transpose(wt[:, :, k]).astype(f32)

    zW = jnp.zeros((W, W), f32)

    def paired_conv3(wt):
        # rows = slab blocks [x(2r-1), x(2r), x(2r+1), x(2r+2)];
        # cols = [output at 2r | output at 2r+1]
        m0, m1, m2 = tap(wt, 0), tap(wt, 1), tap(wt, 2)        # taps t-1, t, t+1
        return jnp.block([[m0, zW],
                          [m1, m0],
                          [m2, m1],
                          [zW, m2]])                           # (4W, 2W)

    emb = p["emb"].astype(f32)
    zE = jnp.zeros((bins, W), f32)
    emb2 = jnp.block([[emb, zE], [zE, emb]])                   # (2*bins, 2W)

    w_r2 = jnp.transpose(p["res_c2_w"][:, :, 0]).astype(f32)   # (Cin, Cout)
    w_r2_p = jnp.block([[w_r2, zW], [zW, w_r2]])               # (2W, 2W)

    wT = p["convT_w"].astype(f32)                              # PyTorch (Cin, Cout, 4)
    t0, t1, t2, t3 = (wT[:, :, k] for k in range(4))
    # rows = slab blocks [h(2r-1), h(2r), h(2r+1), h(2r+2)];
    # cols = [even(2r), odd(2r), even(2r+1), odd(2r+1)]
    w_t_p = jnp.block([[t3, zW, zW, zW],
                       [t1, t2, t3, zW],
                       [zW, t0, t1, t2],
                       [zW, zW, zW, t0]])                      # (4W, 4W)

    def pad128(a):
        return jnp.pad(a, ((0, 128 - a.shape[0]), (0, 128 - a.shape[1])))

    # ONE bf16 weight slab (5,128,128): [emb2, conv_in, res_conv3, res_1x1, convT]
    wslab = jnp.stack([pad128(emb2),
                       pad128(paired_conv3(p["conv_in_w"])),
                       pad128(paired_conv3(p["res_c1_w"])),
                       pad128(w_r2_p),
                       pad128(w_t_p)]).astype(jnp.bfloat16)

    def packed_vec(v, reps):
        v = jnp.tile(v.astype(f32), reps)
        return jnp.pad(v, (0, 128 - v.shape[0]))

    # ONE f32 vector slab (8,128): biases (phase-tiled), gamma, beta.
    vecs = jnp.stack([packed_vec(p["conv_in_b"], 2), packed_vec(p["res_c1_b"], 2),
                      packed_vec(p["res_c2_b"], 2), packed_vec(p["convT_b"], 4),
                      packed_vec(p["ln_g"], 1), packed_vec(p["ln_b"], 1),
                      jnp.zeros((128,), f32), jnp.zeros((128,), f32)])

    tok_pair = tokens.reshape(R, 2).astype(jnp.int32)

    args = [tok_pair, wslab, vecs]
    has_xcond = x_cond is not None
    if has_xcond:
        args.append(x_cond.reshape(R, C2).astype(f32))

    kernel = _make_conditioner_kernel(N, T, W, bins, res_scale, eps, has_xcond)
    out = pl.pallas_call(
        kernel,
        out_shape=jax.ShapeDtypeStruct((R, KD), jnp.float32),
    )(*args)
    # (R, 4W) row-major == [..., y(n,2t), y(n,2t+1), y(n,2t+2), y(n,2t+3), ...]
    return out.reshape(N, stride_t * T, W)


# --------------------------- pure-JAX reference ------------------------------------

def _conv_ref(x, w_pt, b, pad, dil=1):
    w = jnp.transpose(w_pt, (2, 1, 0))                         # (K, Cin, Cout)
    y = jax.lax.conv_general_dilated(
        x, w, window_strides=(1,), padding=[(pad, pad)], rhs_dilation=(dil,),
        dimension_numbers=("NWC", "WIO", "NWC"),
        precision=jax.lax.Precision.HIGHEST)
    return y + b


def conditioner_ref(tokens, p, *, stride_t=2):
    x = p["emb"][tokens]                                       # (N, T, W)
    h = _conv_ref(x, p["conv_in_w"], p["conv_in_b"], 1)
    t1 = _conv_ref(jax.nn.relu(h), p["res_c1_w"], p["res_c1_b"], 1)
    h = h + 1.0 * _conv_ref(jax.nn.relu(t1), p["res_c2_w"], p["res_c2_b"], 0)
    wT = p["convT_w"]
    f = wT.shape[-1]
    w = jnp.transpose(jnp.flip(wT, -1), (2, 0, 1))             # (f, Cin, Cout)
    h = jax.lax.conv_general_dilated(
        h, w, window_strides=(1,), padding=[(f - 1 - stride_t // 2,) * 2],
        lhs_dilation=(stride_t,), dimension_numbers=("NWC", "WIO", "NWC"),
        precision=jax.lax.Precision.HIGHEST) + p["convT_b"]
    mean = h.mean(-1, keepdims=True)
    var = ((h - mean) ** 2).mean(-1, keepdims=True)
    return (h - mean) * jax.lax.rsqrt(var + 1e-5) * p["ln_g"] + p["ln_b"]


# ----------------------------------- main -------------------------------------------

if __name__ == "__main__":
    N, T, W, bins = 2, 8, 32, 64
    stride_t = 2                                               # down_t=1 -> 2x upsample

    key = jax.random.PRNGKey(0)
    ks = jax.random.split(key, 10)
    params = {
        "emb":        0.02 * jax.random.normal(ks[0], (bins, W), jnp.float32),
        "conv_in_w":  0.05 * jax.random.normal(ks[1], (W, W, 3), jnp.float32),
        "conv_in_b":  0.05 * jax.random.normal(ks[2], (W,), jnp.float32),
        "res_c1_w":   0.05 * jax.random.normal(ks[3], (W, W, 3), jnp.float32),
        "res_c1_b":   0.05 * jax.random.normal(ks[4], (W,), jnp.float32),
        "res_c2_w":   0.05 * jax.random.normal(ks[5], (W, W, 1), jnp.float32),
        "res_c2_b":   0.05 * jax.random.normal(ks[6], (W,), jnp.float32),
        "convT_w":    0.05 * jax.random.normal(ks[7], (W, W, 2 * stride_t), jnp.float32),
        "convT_b":    0.05 * jax.random.normal(ks[8], (W,), jnp.float32),
        "ln_g":       jnp.ones((W,), jnp.float32),
        "ln_b":       jnp.zeros((W,), jnp.float32),
    }
    tokens = jax.random.randint(ks[9], (N, T), 0, bins)

    out = conditioner_forward(tokens, params, x_cond=None, stride_t=stride_t)
    out = jax.block_until_ready(out)

    assert out.shape == (N, T * stride_t, W), out.shape

    ref = conditioner_ref(tokens, params, stride_t=stride_t)
    if not jnp.allclose(out, ref, atol=2e-2, rtol=2e-2):
        max_err = float(jnp.max(jnp.abs(out - ref)))
        raise AssertionError(f"Pallas output mismatch vs reference, max |err| = {max_err}")

    print("KERNEL_OK")
</pallas_src>

<mosaic_0001>
module attributes {stable_mosaic.version = 11 : i64} {
  func.func @kernel(%arg0: memref<8x2xi32, #tpu.memory_space<vmem>>, %arg1: memref<5x128x128xbf16, #tpu.memory_space<vmem>>, %arg2: memref<8x128xf32, #tpu.memory_space<vmem>>, %arg3: memref<8x128xf32, #tpu.memory_space<vmem>>) attributes {dimension_semantics = [], scalar_prefetch = 0 : i64, scratch_operands = 0 : i64, tpu.core_type = #tpu.core_type<tc>} {
    %c0 = arith.constant 0 : index
    %c0_0 = arith.constant 0 : index
    %0 = vector.load %arg2[%c0, %c0_0] : memref<8x128xf32, #tpu.memory_space<vmem>>, vector<8x128xf32>
    %1 = vector.extract_strided_slice %0 {offsets = [0, 0], sizes = [1, 64], strides = [1, 1]} : vector<8x128xf32> to vector<1x64xf32>
    %2 = vector.extract_strided_slice %0 {offsets = [1, 0], sizes = [1, 64], strides = [1, 1]} : vector<8x128xf32> to vector<1x64xf32>
    %3 = vector.extract_strided_slice %0 {offsets = [2, 0], sizes = [1, 64], strides = [1, 1]} : vector<8x128xf32> to vector<1x64xf32>
    %4 = vector.extract_strided_slice %0 {offsets = [3, 0], sizes = [1, 128], strides = [1, 1]} : vector<8x128xf32> to vector<1x128xf32>
    %5 = vector.extract_strided_slice %0 {offsets = [4, 0], sizes = [1, 32], strides = [1, 1]} : vector<8x128xf32> to vector<1x32xf32>
    %6 = vector.extract_strided_slice %0 {offsets = [5, 0], sizes = [1, 32], strides = [1, 1]} : vector<8x128xf32> to vector<1x32xf32>
    %c0_1 = arith.constant 0 : index
    %c0_2 = arith.constant 0 : index
    %7 = vector.load %arg0[%c0_1, %c0_2] : memref<8x2xi32, #tpu.memory_space<vmem>>, vector<8x2xi32>
    %8 = tpu.iota {dimensions = array<i32: 1>} : vector<8x128xi32>
    %c64_i32 = arith.constant 64 : i32
    %9 = vector.broadcast %c64_i32 : i32 to vector<8x128xi32>
    %10 = arith.cmpi slt, %8, %9 : vector<8x128xi32>
    %11 = vector.extract_strided_slice %7 {offsets = [0, 0], sizes = [8, 1], strides = [1, 1]} : vector<8x2xi32> to vector<8x1xi32>
    %12 = vector.extract_strided_slice %7 {offsets = [0, 1], sizes = [8, 1], strides = [1, 1]} : vector<8x2xi32> to vector<8x1xi32>
    %c64_i32_3 = arith.constant 64 : i32
    %13 = vector.broadcast %c64_i32_3 : i32 to vector<8x1xi32>
    %14 = arith.addi %12, %13 : vector<8x1xi32>
    %15 = vector.shape_cast %11 : vector<8x1xi32> to vector<8x1xi32>
    %16 = vector.broadcast %15 : vector<8x1xi32> to vector<8x128xi32>
    %17 = vector.shape_cast %14 : vector<8x1xi32> to vector<8x1xi32>
    %18 = vector.broadcast %17 : vector<8x1xi32> to vector<8x128xi32>
    %19 = arith.select %10, %16, %18 : vector<8x128xi1>, vector<8x128xi32>
    %20 = arith.cmpi eq, %8, %19 : vector<8x128xi32>
    %21 = arith.extui %20 : vector<8x128xi1> to vector<8x128xi32>
    %22 = arith.sitofp %21 : vector<8x128xi32> to vector<8x128xf32>
    %23 = arith.truncf %22 : vector<8x128xf32> to vector<8x128xbf16>
    %c0_4 = arith.constant 0 : index
    %c0_5 = arith.constant 0 : index
    %c0_6 = arith.constant 0 : index
    %24 = vector.load %arg1[%c0_4, %c0_5, %c0_6] : memref<5x128x128xbf16, #tpu.memory_space<vmem>>, vector<1x128x128xbf16>
    %25 = vector.shape_cast %24 : vector<1x128x128xbf16> to vector<128x128xbf16>
    %26 = vector.extract_strided_slice %25 {offsets = [0, 0], sizes = [128, 64], strides = [1, 1]} : vector<128x128xbf16> to vector<128x64xbf16>
    %cst = arith.constant dense<0.000000e+00> : vector<8x64xf32>
    %27 = tpu.matmul %23, %26, %cst {dimension_numbers = #tpu.dot_dimension_numbers<[1], [0], [0], [1], [0, 0, 1, 1], [], []>} : vector<8x128xbf16>, vector<128x64xbf16>, vector<8x64xf32> -> vector<8x64xf32>
    %28 = tpu.iota {dimensions = array<i32: 0>} : vector<8x1xi32>
    %c4_i32 = arith.constant 4 : i32
    %c0_i32 = arith.constant 0 : i32
    %29 = arith.cmpi eq, %c4_i32, %c0_i32 : i32
    %c1_i32 = arith.constant 1 : i32
    %30 = arith.select %29, %c1_i32, %c4_i32 : i32
    %31 = vector.broadcast %30 : i32 to vector<8x1xi32>
    %32 = arith.remsi %28, %31 : vector<8x1xi32>
    %c0_i32_7 = arith.constant 0 : i32
    %33 = vector.broadcast %c0_i32_7 : i32 to vector<8x1xi32>
    %34 = arith.cmpi ne, %32, %33 : vector<8x1xi32>
    %c0_i32_8 = arith.constant 0 : i32
    %35 = vector.broadcast %c0_i32_8 : i32 to vector<8x1xi32>
    %36 = arith.cmpi slt, %32, %35 : vector<8x1xi32>
    %c0_i32_9 = arith.constant 0 : i32
    %37 = arith.cmpi slt, %30, %c0_i32_9 : i32
    %38 = vector.broadcast %37 : i1 to vector<8x1xi1>
    %39 = vector.broadcast %38 : vector<8x1xi1> to vector<8x1xi1>
    %40 = arith.xori %36, %39 : vector<8x1xi1>
    %41 = arith.andi %40, %34 : vector<8x1xi1>
    %42 = vector.broadcast %30 : i32 to vector<8x1xi32>
    %43 = arith.addi %32, %42 : vector<8x1xi32>
    %44 = arith.select %41, %43, %32 : vector<8x1xi1>, vector<8x1xi32>
    %c0_i32_10 = arith.constant 0 : i32
    %45 = vector.broadcast %c0_i32_10 : i32 to vector<8x1xi32>
    %46 = arith.cmpi eq, %44, %45 : vector<8x1xi32>
    %c4_i32_11 = arith.constant 4 : i32
    %c0_i32_12 = arith.constant 0 : i32
    %47 = arith.cmpi eq, %c4_i32_11, %c0_i32_12 : i32
    %c1_i32_13 = arith.constant 1 : i32
    %48 = arith.select %47, %c1_i32_13, %c4_i32_11 : i32
    %49 = vector.broadcast %48 : i32 to vector<8x1xi32>
    %50 = arith.remsi %28, %49 : vector<8x1xi32>
    %c0_i32_14 = arith.constant 0 : i32
    %51 = vector.broadcast %c0_i32_14 : i32 to vector<8x1xi32>
    %52 = arith.cmpi ne, %50, %51 : vector<8x1xi32>
    %c0_i32_15 = arith.constant 0 : i32
    %53 = vector.broadcast %c0_i32_15 : i32 to vector<8x1xi32>
    %54 = arith.cmpi slt, %50, %53 : vector<8x1xi32>
    %c0_i32_16 = arith.constant 0 : i32
    %55 = arith.cmpi slt, %48, %c0_i32_16 : i32
    %56 = vector.broadcast %55 : i1 to vector<8x1xi1>
    %57 = vector.broadcast %56 : vector<8x1xi1> to vector<8x1xi1>
    %58 = arith.xori %54, %57 : vector<8x1xi1>
    %59 = arith.andi %58, %52 : vector<8x1xi1>
    %60 = vector.broadcast %48 : i32 to vector<8x1xi32>
    %61 = arith.addi %50, %60 : vector<8x1xi32>
    %62 = arith.select %59, %61, %50 : vector<8x1xi1>, vector<8x1xi32>
    %c3_i32 = arith.constant 3 : i32
    %63 = vector.broadcast %c3_i32 : i32 to vector<8x1xi32>
    %64 = arith.cmpi eq, %62, %63 : vector<8x1xi32>
    %c1_i32_17 = arith.constant 1 : i32
    %65 = tpu.dynamic_rotate %27 by %c1_i32_17 dim 0 : vector<8x64xf32>, i32 -> vector<8x64xf32>
    %c7_i32 = arith.constant 7 : i32
    %66 = tpu.dynamic_rotate %27 by %c7_i32 dim 0 : vector<8x64xf32>, i32 -> vector<8x64xf32>
    %67 = vector.extract_strided_slice %65 {offsets = [0, 32], sizes = [8, 32], strides = [1, 1]} : vector<8x64xf32> to vector<8x32xf32>
    %cst_18 = arith.constant 0.000000e+00 : f32
    %68 = vector.shape_cast %46 : vector<8x1xi1> to vector<8x1xi1>
    %69 = vector.broadcast %68 : vector<8x1xi1> to vector<8x32xi1>
    %70 = vector.broadcast %cst_18 : f32 to vector<8x32xf32>
    %71 = arith.select %69, %70, %67 : vector<8x32xi1>, vector<8x32xf32>
    %72 = vector.extract_strided_slice %66 {offsets = [0, 0], sizes = [8, 32], strides = [1, 1]} : vector<8x64xf32> to vector<8x32xf32>
    %cst_19 = arith.constant 0.000000e+00 : f32
    %73 = vector.shape_cast %64 : vector<8x1xi1> to vector<8x1xi1>
    %74 = vector.broadcast %73 : vector<8x1xi1> to vector<8x32xi1>
    %75 = vector.broadcast %cst_19 : f32 to vector<8x32xf32>
    %76 = arith.select %74, %75, %72 : vector<8x32xi1>, vector<8x32xf32>
    %77 = tpu.concatenate %71, %27, %76 in 1 : vector<8x32xf32>, vector<8x64xf32>, vector<8x32xf32> -> vector<8x128xf32>
    %78 = arith.truncf %77 : vector<8x128xf32> to vector<8x128xbf16>
    %c1 = arith.constant 1 : index
    %c0_20 = arith.constant 0 : index
    %c0_21 = arith.constant 0 : index
    %79 = vector.load %arg1[%c1, %c0_20, %c0_21] : memref<5x128x128xbf16, #tpu.memory_space<vmem>>, vector<1x128x128xbf16>
    %80 = vector.shape_cast %79 : vector<1x128x128xbf16> to vector<128x128xbf16>
    %81 = vector.extract_strided_slice %80 {offsets = [0, 0], sizes = [128, 64], strides = [1, 1]} : vector<128x128xbf16> to vector<128x64xbf16>
    %cst_22 = arith.constant dense<0.000000e+00> : vector<8x64xf32>
    %82 = tpu.matmul %78, %81, %cst_22 {dimension_numbers = #tpu.dot_dimension_numbers<[1], [0], [0], [1], [0, 0, 1, 1], [], []>} : vector<8x128xbf16>, vector<128x64xbf16>, vector<8x64xf32> -> vector<8x64xf32>
    %83 = vector.broadcast %1 : vector<1x64xf32> to vector<8x64xf32>
    %84 = arith.addf %82, %83 : vector<8x64xf32>
    %cst_23 = arith.constant 0.000000e+00 : f32
    %85 = vector.broadcast %cst_23 : f32 to vector<8x64xf32>
    %86 = arith.maximumf %84, %85 : vector<8x64xf32>
    %c1_i32_24 = arith.constant 1 : i32
    %87 = tpu.dynamic_rotate %86 by %c1_i32_24 dim 0 : vector<8x64xf32>, i32 -> vector<8x64xf32>
    %c7_i32_25 = arith.constant 7 : i32
    %88 = tpu.dynamic_rotate %86 by %c7_i32_25 dim 0 : vector<8x64xf32>, i32 -> vector<8x64xf32>
    %89 = vector.extract_strided_slice %87 {offsets = [0, 32], sizes = [8, 32], strides = [1, 1]} : vector<8x64xf32> to vector<8x32xf32>
    %cst_26 = arith.constant 0.000000e+00 : f32
    %90 = vector.shape_cast %46 : vector<8x1xi1> to vector<8x1xi1>
    %91 = vector.broadcast %90 : vector<8x1xi1> to vector<8x32xi1>
    %92 = vector.broadcast %cst_26 : f32 to vector<8x32xf32>
    %93 = arith.select %91, %92, %89 : vector<8x32xi1>, vector<8x32xf32>
    %94 = vector.extract_strided_slice %88 {offsets = [0, 0], sizes = [8, 32], strides = [1, 1]} : vector<8x64xf32> to vector<8x32xf32>
    %cst_27 = arith.constant 0.000000e+00 : f32
    %95 = vector.shape_cast %64 : vector<8x1xi1> to vector<8x1xi1>
    %96 = vector.broadcast %95 : vector<8x1xi1> to vector<8x32xi1>
    %97 = vector.broadcast %cst_27 : f32 to vector<8x32xf32>
    %98 = arith.select %96, %97, %94 : vector<8x32xi1>, vector<8x32xf32>
    %99 = tpu.concatenate %93, %86, %98 in 1 : vector<8x32xf32>, vector<8x64xf32>, vector<8x32xf32> -> vector<8x128xf32>
    %100 = arith.truncf %99 : vector<8x128xf32> to vector<8x128xbf16>
    %c2 = arith.constant 2 : index
    %c0_28 = arith.constant 0 : index
    %c0_29 = arith.constant 0 : index
    %101 = vector.load %arg1[%c2, %c0_28, %c0_29] : memref<5x128x128xbf16, #tpu.memory_space<vmem>>, vector<1x128x128xbf16>
    %102 = vector.shape_cast %101 : vector<1x128x128xbf16> to vector<128x128xbf16>
    %103 = vector.extract_strided_slice %102 {offsets = [0, 0], sizes = [128, 64], strides = [1, 1]} : vector<128x128xbf16> to vector<128x64xbf16>
    %cst_30 = arith.constant dense<0.000000e+00> : vector<8x64xf32>
    %104 = tpu.matmul %100, %103, %cst_30 {dimension_numbers = #tpu.dot_dimension_numbers<[1], [0], [0], [1], [0, 0, 1, 1], [], []>} : vector<8x128xbf16>, vector<128x64xbf16>, vector<8x64xf32> -> vector<8x64xf32>
    %105 = vector.broadcast %2 : vector<1x64xf32> to vector<8x64xf32>
    %106 = arith.addf %104, %105 : vector<8x64xf32>
    %cst_31 = arith.constant 0.000000e+00 : f32
    %107 = vector.broadcast %cst_31 : f32 to vector<8x64xf32>
    %108 = arith.maximumf %106, %107 : vector<8x64xf32>
    %109 = arith.truncf %108 : vector<8x64xf32> to vector<8x64xbf16>
    %c3 = arith.constant 3 : index
    %c0_32 = arith.constant 0 : index
    %c0_33 = arith.constant 0 : index
    %110 = vector.load %arg1[%c3, %c0_32, %c0_33] : memref<5x128x128xbf16, #tpu.memory_space<vmem>>, vector<1x128x128xbf16>
    %111 = vector.shape_cast %110 : vector<1x128x128xbf16> to vector<128x128xbf16>
    %112 = vector.extract_strided_slice %111 {offsets = [0, 0], sizes = [64, 64], strides = [1, 1]} : vector<128x128xbf16> to vector<64x64xbf16>
    %cst_34 = arith.constant dense<0.000000e+00> : vector<8x64xf32>
    %113 = tpu.matmul %109, %112, %cst_34 {dimension_numbers = #tpu.dot_dimension_numbers<[1], [0], [0], [1], [0, 0, 1, 1], [], []>} : vector<8x64xbf16>, vector<64x64xbf16>, vector<8x64xf32> -> vector<8x64xf32>
    %114 = vector.broadcast %3 : vector<1x64xf32> to vector<8x64xf32>
    %115 = arith.addf %113, %114 : vector<8x64xf32>
    %116 = arith.addf %84, %115 : vector<8x64xf32>
    %c1_i32_35 = arith.constant 1 : i32
    %117 = tpu.dynamic_rotate %116 by %c1_i32_35 dim 0 : vector<8x64xf32>, i32 -> vector<8x64xf32>
    %c7_i32_36 = arith.constant 7 : i32
    %118 = tpu.dynamic_rotate %116 by %c7_i32_36 dim 0 : vector<8x64xf32>, i32 -> vector<8x64xf32>
    %119 = vector.extract_strided_slice %117 {offsets = [0, 32], sizes = [8, 32], strides = [1, 1]} : vector<8x64xf32> to vector<8x32xf32>
    %cst_37 = arith.constant 0.000000e+00 : f32
    %120 = vector.shape_cast %46 : vector<8x1xi1> to vector<8x1xi1>
    %121 = vector.broadcast %120 : vector<8x1xi1> to vector<8x32xi1>
    %122 = vector.broadcast %cst_37 : f32 to vector<8x32xf32>
    %123 = arith.select %121, %122, %119 : vector<8x32xi1>, vector<8x32xf32>
    %124 = vector.extract_strided_slice %118 {offsets = [0, 0], sizes = [8, 32], strides = [1, 1]} : vector<8x64xf32> to vector<8x32xf32>
    %cst_38 = arith.constant 0.000000e+00 : f32
    %125 = vector.shape_cast %64 : vector<8x1xi1> to vector<8x1xi1>
    %126 = vector.broadcast %125 : vector<8x1xi1> to vector<8x32xi1>
    %127 = vector.broadcast %cst_38 : f32 to vector<8x32xf32>
    %128 = arith.select %126, %127, %124 : vector<8x32xi1>, vector<8x32xf32>
    %129 = tpu.concatenate %123, %116, %128 in 1 : vector<8x32xf32>, vector<8x64xf32>, vector<8x32xf32> -> vector<8x128xf32>
    %130 = arith.truncf %129 : vector<8x128xf32> to vector<8x128xbf16>
    %c4 = arith.constant 4 : index
    %c0_39 = arith.constant 0 : index
    %c0_40 = arith.constant 0 : index
    %131 = vector.load %arg1[%c4, %c0_39, %c0_40] : memref<5x128x128xbf16, #tpu.memory_space<vmem>>, vector<1x128x128xbf16>
    %132 = vector.shape_cast %131 : vector<1x128x128xbf16> to vector<128x128xbf16>
    %cst_41 = arith.constant dense<0.000000e+00> : vector<8x128xf32>
    %133 = tpu.matmul %130, %132, %cst_41 {dimension_numbers = #tpu.dot_dimension_numbers<[1], [0], [0], [1], [0, 0, 1, 1], [], []>} : vector<8x128xbf16>, vector<128x128xbf16>, vector<8x128xf32> -> vector<8x128xf32>
    %134 = vector.broadcast %4 : vector<1x128xf32> to vector<8x128xf32>
    %135 = arith.addf %133, %134 : vector<8x128xf32>
    %136 = vector.extract_strided_slice %135 {offsets = [0, 0], sizes = [8, 32], strides = [1, 1]} : vector<8x128xf32> to vector<8x32xf32>
    %137 = vector.extract_strided_slice %135 {offsets = [0, 32], sizes = [8, 32], strides = [1, 1]} : vector<8x128xf32> to vector<8x32xf32>
    %138 = vector.extract_strided_slice %135 {offsets = [0, 64], sizes = [8, 32], strides = [1, 1]} : vector<8x128xf32> to vector<8x32xf32>
    %139 = vector.extract_strided_slice %135 {offsets = [0, 96], sizes = [8, 32], strides = [1, 1]} : vector<8x128xf32> to vector<8x32xf32>
    %140 = tpu.concatenate %136, %137, %138, %139 in 0 : vector<8x32xf32>, vector<8x32xf32>, vector<8x32xf32>, vector<8x32xf32> -> vector<32x32xf32>
    %cst_42 = arith.constant dense<0.000000e+00> : vector<32xf32>
    %141 = vector.multi_reduction <add>, %140, %cst_42 [1] : vector<32x32xf32> to vector<32xf32>
    %142 = vector.shape_cast %141 : vector<32xf32> to vector<32x1xf32>
    %cst_43 = arith.constant 3.200000e+01 : f32
    %143 = vector.broadcast %cst_43 : f32 to vector<32x1xf32>
    %144 = arith.divf %142, %143 : vector<32x1xf32>
    %145 = vector.broadcast %144 : vector<32x1xf32> to vector<32x32xf32>
    %146 = arith.subf %140, %145 : vector<32x32xf32>
    %147 = arith.mulf %146, %146 : vector<32x32xf32>
    %cst_44 = arith.constant dense<0.000000e+00> : vector<32xf32>
    %148 = vector.multi_reduction <add>, %147, %cst_44 [1] : vector<32x32xf32> to vector<32xf32>
    %149 = vector.shape_cast %148 : vector<32xf32> to vector<32x1xf32>
    %cst_45 = arith.constant 3.200000e+01 : f32
    %150 = vector.broadcast %cst_45 : f32 to vector<32x1xf32>
    %151 = arith.divf %149, %150 : vector<32x1xf32>
    %cst_46 = arith.constant 9.99999974E-6 : f32
    %152 = vector.broadcast %cst_46 : f32 to vector<32x1xf32>
    %153 = arith.addf %151, %152 : vector<32x1xf32>
    %154 = math.rsqrt %153 : vector<32x1xf32>
    %155 = vector.broadcast %154 : vector<32x1xf32> to vector<32x32xf32>
    %156 = arith.mulf %146, %155 : vector<32x32xf32>
    %157 = vector.broadcast %5 : vector<1x32xf32> to vector<32x32xf32>
    %158 = arith.mulf %156, %157 : vector<32x32xf32>
    %159 = vector.broadcast %6 : vector<1x32xf32> to vector<32x32xf32>
    %160 = arith.addf %158, %159 : vector<32x32xf32>
    %161 = vector.extract_strided_slice %160 {offsets = [0, 0], sizes = [8, 32], strides = [1, 1]} : vector<32x32xf32> to vector<8x32xf32>
    %162 = vector.extract_strided_slice %160 {offsets = [8, 0], sizes = [8, 32], strides = [1, 1]} : vector<32x32xf32> to vector<8x32xf32>
    %163 = vector.extract_strided_slice %160 {offsets = [16, 0], sizes = [8, 32], strides = [1, 1]} : vector<32x32xf32> to vector<8x32xf32>
    %164 = vector.extract_strided_slice %160 {offsets = [24, 0], sizes = [8, 32], strides = [1, 1]} : vector<32x32xf32> to vector<8x32xf32>
    %165 = tpu.concatenate %161, %162, %163, %164 in 1 : vector<8x32xf32>, vector<8x32xf32>, vector<8x32xf32>, vector<8x32xf32> -> vector<8x128xf32>
    %c0_47 = arith.constant 0 : index
    %c0_48 = arith.constant 0 : index
    %166 = vector.load %arg3[%c0_47, %c0_48] : memref<8x128xf32, #tpu.memory_space<vmem>>, vector<8x128xf32>
    tpu.vector_store %arg3[%c0_47, %c0_48], %165 {strides = array<i32>} : memref<8x128xf32, #tpu.memory_space<vmem>>, vector<8x128xf32>,
    return
  }
}

</mosaic_0001>

<llo_original>
// kernel: tpu_custom_call.1
$region0: #{tpu_custom_call.1}
  #allocation0 [shape = 'u32[]', space=smem, size = 0x4, offset = 0x4, fixed_abs, tag = 'smem constant byte address 0x4 - core index']
  #allocation1 [shape = 'u32[144,128]{1,0:T(1,128)}', space=vmem, size = 0x12000, scoped, tag = 'internal scratch']
  %s0 = inlined_call_operand.vmem [shape: s32[8,2], index: 0, kind: input, shape index: {}]
  %s1 = inlined_call_operand.hbm [shape: bf16[5,128,128], index: 1, kind: input, shape index: {}]
  %s2 = inlined_call_operand.vmem [shape: f32[8,128], index: 2, kind: input, shape index: {}]
  %s3 = inlined_call_operand.hbm [shape: f32[8,128], index: 3, kind: output, shape index: {}]
  %s4 = sld [smem:[#allocation0]]
  $region26: #{tpu_custom_call.1} parent=0
    _
  %s6 = ssub.s32 1, %s4
  %s7 = scalar_select 0, %s6, %s4
  $region1: #{tpu_custom_call.1} parent=0
    #allocation2 [shape = 'u8[163840]{0}', space=vmem, size = 0x28000, scoped, tag = 'input window, operand 1, single buffered']
    #allocation3 [shape = 's32[1]{0}', space=sflag, size = 0x4, scoped, tag = 'scoped memory for tpu_custom_call.1']
    #allocation4 [shape = 's32[1]{0}', space=sflag, size = 0x4, scoped, tag = 'scoped memory for tpu_custom_call.1']
    #allocation5 [shape = 'u8[4096]{0}', space=vmem, size = 0x1000, scoped, tag = 'output window, operand 0, single buffered']
    %8 = vsyncpa [#allocation3], 0
    %9 = vsyncpa [#allocation4], 0
    // Predicated region
    $region2: #{tpu_custom_call.1} parent=1 // pred_check
      _
    $region3: #{tpu_custom_call.1} parent=1 // pred_check_branch
      %11 = sbr.rel (0) target = $region5
    $region4: #{tpu_custom_call.1} parent=1 // pred_region
      _
    $region5: #{tpu_custom_call.1} parent=1 // pred_fallthru
      _
    // Predicated region
    $region6: #{tpu_custom_call.1} parent=1 // pred_check
      _
    $region7: #{tpu_custom_call.1} parent=1 // pred_check_branch
      %13 = sbr.rel (0) target = $region9
    $region8: #{tpu_custom_call.1} parent=1 // pred_region
      %s15 = ssub.s32 5120, 5120
      %16 = vsyncadd [#allocation3], %s15
      %s17 = sshll.u32 [#allocation2], 4
      %s18 = int_to_ptr.vmem [resolvable:$true] %s17
      %23 = dma.hbm_to_vmem [thread:$0]  %s1, 5120, %s18, [#allocation3], 64, 64, 4
    $region9: #{tpu_custom_call.1} parent=1 // pred_fallthru
      _
    // Predicated region
    $region10: #{tpu_custom_call.1} parent=1 // pred_check
      _
    $region11: #{tpu_custom_call.1} parent=1 // pred_check_branch
      %25 = sbr.rel (0) target = $region13
    $region12: #{tpu_custom_call.1} parent=1 // pred_region
      _
    $region13: #{tpu_custom_call.1} parent=1 // pred_fallthru
      _
    // Predicated region
    $region14: #{tpu_custom_call.1} parent=1 // pred_check
      _
    $region15: #{tpu_custom_call.1} parent=1 // pred_check_branch
      %27 = sbr.rel (0) target = $region17
    $region16: #{tpu_custom_call.1} parent=1 // pred_region
      %28 = dma.done [#allocation3], 5120
    $region17: #{tpu_custom_call.1} parent=1 // pred_fallthru
      _
    %v30 = vld [vmem:[%s2] sm:$0xff]
    %v31 = vld [vmem:[%s0] sm:$0xff]
    %v32 = vlaneseq
    %v33 = vand.u32 %v32, 127
    %vm34 = vcmp.lt.s32.totalorder %v33, 64
    %v35 = vadd.s32 %v31, 64
    %36 = vset.pattern.permute.xlu0 0
    %37 = vperm.xlu0 %36, %v31
    %v38 = vpop.permute.xlu0 %37
    %39 = vset.pattern.permute.xlu0 1
    %40 = vperm.xlu0 %39, %v35
    %v41 = vpop.permute.xlu0 %40
    %v42 = vsel %vm34, %v38, %v41
    %vm43 = vcmp.eq.s32.totalorder %v33, %v42
    %v44 = vsel %vm43, 1, 0
    %v45 = vcvt.s32.f32 %v44
    %v46 = vpack.c.bf16 %v45, %v45
    %v47 = vld [vmem:[#allocation2] sm:$0xf]
    %v48 = vld [vmem:[#allocation2 + $0x4] sm:$0xf]
    %v49 = vld [vmem:[#allocation2 + $0x8] sm:$0xf]
    %v50 = vld [vmem:[#allocation2 + $0xc] sm:$0xf]
    %v51 = vld [vmem:[#allocation2 + $0x10] sm:$0xf]
    %v52 = vld [vmem:[#allocation2 + $0x14] sm:$0xf]
    %v53 = vld [vmem:[#allocation2 + $0x18] sm:$0xf]
    %v54 = vld [vmem:[#allocation2 + $0x1c] sm:$0xf]
    %v55 = vld [vmem:[#allocation2 + $0x20] sm:$0xf]
    %v56 = vld [vmem:[#allocation2 + $0x24] sm:$0xf]
    %v57 = vld [vmem:[#allocation2 + $0x28] sm:$0xf]
    %v58 = vld [vmem:[#allocation2 + $0x2c] sm:$0xf]
    %v59 = vld [vmem:[#allocation2 + $0x30] sm:$0xf]
    %v60 = vld [vmem:[#allocation2 + $0x34] sm:$0xf]
    %v61 = vld [vmem:[#allocation2 + $0x38] sm:$0xf]
    %v62 = vld [vmem:[#allocation2 + $0x3c] sm:$0xf]
    %v79 = vunpack.c.l.b16 %v47
    %v80 = vunpack.c.l.b16 %v48
    %v81 = vunpack.c.l.b16 %v49
    %v82 = vunpack.c.l.b16 %v50
    %v83 = vunpack.c.l.b16 %v51
    %v84 = vunpack.c.l.b16 %v52
    %v85 = vunpack.c.l.b16 %v53
    %v86 = vunpack.c.l.b16 %v54
    %v87 = vunpack.c.l.b16 %v55
    %v88 = vunpack.c.l.b16 %v56
    %v89 = vunpack.c.l.b16 %v57
    %v90 = vunpack.c.l.b16 %v58
    %v91 = vunpack.c.l.b16 %v59
    %v92 = vunpack.c.l.b16 %v60
    %v93 = vunpack.c.l.b16 %v61
    %v94 = vunpack.c.l.b16 %v62
    %v95 = vpack.c.b16 %v80, %v79
    %v96 = vpack.c.b16 %v82, %v81
    %v97 = vpack.c.b16 %v84, %v83
    %v98 = vpack.c.b16 %v86, %v85
    %v99 = vpack.c.b16 %v88, %v87
    %v100 = vpack.c.b16 %v90, %v89
    %v101 = vpack.c.b16 %v92, %v91
    %v102 = vpack.c.b16 %v94, %v93
    %111 = vmatprep.subr.bf16.mxu0 0
    %112 = vmatpush1.bf16.msra.mxu0 %v95
    %113 = vmatprep.subr.bf16.mxu0 0
    %114 = vmatpush1.bf16.msra.mxu0 %v96
    %115 = vmatprep.subr.bf16.mxu0 0
    %116 = vmatpush1.bf16.msra.mxu0 %v97
    %117 = vmatprep.subr.bf16.mxu0 0
    %118 = vmatpush1.bf16.msra.mxu0 %v98
    %119 = vmatprep.subr.bf16.mxu0 0
    %120 = vmatpush1.bf16.msra.mxu0 %v99
    %121 = vmatprep.subr.bf16.mxu0 0
    %122 = vmatpush1.bf16.msra.mxu0 %v100
    %123 = vmatprep.subr.bf16.mxu0 0
    %124 = vmatpush1.bf16.msra.mxu0 %v101
    %125 = vmatprep.subr.bf16.mxu0 0
    %126 = vmatpush1.bf16.msra.mxu0 %v102
    %127 = vmatprep.subr.bf16.mxu0 0
    %128 = vmatpush1.bf16.msra.mxu0 0
    %129 = vmatprep.subr.bf16.mxu0 0
    %130 = vmatpush1.bf16.msra.mxu0 0
    %131 = vmatprep.subr.bf16.mxu0 0
    %132 = vmatpush1.bf16.msra.mxu0 0
    %133 = vmatprep.subr.bf16.mxu0 0
    %134 = vmatpush1.bf16.msra.mxu0 0
    %135 = vmatprep.subr.bf16.mxu0 0
    %136 = vmatpush1.bf16.msra.mxu0 0
    %137 = vmatprep.subr.bf16.mxu0 0
    %138 = vmatpush1.bf16.msra.mxu0 0
    %139 = vmatprep.subr.bf16.mxu0 0
    %140 = vmatpush1.bf16.msra.mxu0 0
    %141 = vmatprep.subr.bf16.mxu0 0
    %142 = vmatpush1.bf16.msra.mxu0 0
    %143 = vmatprep.mubr.bf16.mxu0 0
    %144 = vmatmul.mubr.bf16.gmra.mrb[0].mxu0 %v46
    %v145 = vpop.f32.mrb[0].mxu0
    %v146 = vadd.f32 0.0, %v145
    %v147 = vpop.f32.mrb[0].mxu0
    %v148 = vpop.f32.mrb[0].mxu0
    %v149 = vpop.f32.mrb[0].mxu0
    %150 = vdwg.mxu0
    %v151 = vlaneseq
    %v152 = vshrl.u32 %v151, 7
    %vm153 = vcmp.lt.s32.totalorder %v152, 0
    %v154 = vsub.s32 0, %v152
    %v155 = vsel %vm153, %v154, %v152
    %v156 = vshrl.u32 %v155, 2
    %v157 = vand.u32 %v155, 3
    %v158 = vsub.s32 0, %v157
    %v159 = vsel %vm153, %v158, %v157
    %vm160 = vcmp.ne.s32.totalorder %v159, 0
    %vm161 = vcmp.lt.s32.totalorder %v159, 0
    %vm162 = vmand %vm161, %vm160
    %v163 = vadd.s32 %v159, 4
    %v164 = vsel %vm162, %v163, %v159
    %vm165 = vcmp.eq.s32.totalorder %v164, 0
    %vm166 = vcmp.eq.s32.totalorder %v164, 3
    %v167 = vrot.slane %v146, 7
    %v168 = vrot.slane %v146, 1
    %v169 = vsel %vm165, 1, 0
    %vm170 = vcmp.eq.s32.totalorder %v169, 1
    %v171 = vsel %vm170, 0.0, %v167
    %v172 = vsel %vm166, 1, 0
    %vm173 = vcmp.eq.s32.totalorder %v172, 1
    %v174 = vsel %vm173, 0.0, %v168
    %176 = vrot.lane.b32.xlu0 %v171, 96
    %v177 = vpop.permute.xlu0 %176
    %180 = vrot.lane.b32.xlu0 %v146, 32
    %v181 = vpop.permute.xlu0 %180
    %184 = vrot.lane.b32.xlu0 %v174, 96
    %v185 = vpop.permute.xlu0 %184
    %vm187 = vcmask 261120
    %v188 = vsel %vm187, %v177, %v181
    %vm189 = vcmask 785408
    %v190 = vsel %vm189, %v188, %v185
    %v191 = vpack.c.bf16 %v190, %v190
    %s192 = scalar_lea.vmem [#allocation2], 64
    %v193 = vld [vmem:[%s192] sm:$0xf]
    %v194 = vld [vmem:[%s192 + $0x4] sm:$0xf]
    %v195 = vld [vmem:[%s192 + $0x8] sm:$0xf]
    %v196 = vld [vmem:[%s192 + $0xc] sm:$0xf]
    %v197 = vld [vmem:[%s192 + $0x10] sm:$0xf]
    %v198 = vld [vmem:[%s192 + $0x14] sm:$0xf]
    %v199 = vld [vmem:[%s192 + $0x18] sm:$0xf]
    %v200 = vld [vmem:[%s192 + $0x1c] sm:$0xf]
    %v201 = vld [vmem:[%s192 + $0x20] sm:$0xf]
    %v202 = vld [vmem:[%s192 + $0x24] sm:$0xf]
    %v203 = vld [vmem:[%s192 + $0x28] sm:$0xf]
    %v204 = vld [vmem:[%s192 + $0x2c] sm:$0xf]
    %v205 = vld [vmem:[%s192 + $0x30] sm:$0xf]
    %v206 = vld [vmem:[%s192 + $0x34] sm:$0xf]
    %v207 = vld [vmem:[%s192 + $0x38] sm:$0xf]
    %v208 = vld [vmem:[%s192 + $0x3c] sm:$0xf]
    %v209 = vlaneseq
    %v210 = vshrl.u32 %v209, 7
    %v211 = vsub.s32 0, %v210
    %v212 = vrot.slane %v30, %v211
    %v229 = vunpack.c.l.b16 %v193
    %v230 = vunpack.c.l.b16 %v194
    %v231 = vunpack.c.l.b16 %v195
    %v232 = vunpack.c.l.b16 %v196
    %v233 = vunpack.c.l.b16 %v197
    %v234 = vunpack.c.l.b16 %v198
    %v235 = vunpack.c.l.b16 %v199
    %v236 = vunpack.c.l.b16 %v200
    %v237 = vunpack.c.l.b16 %v201
    %v238 = vunpack.c.l.b16 %v202
    %v239 = vunpack.c.l.b16 %v203
    %v240 = vunpack.c.l.b16 %v204
    %v241 = vunpack.c.l.b16 %v205
    %v242 = vunpack.c.l.b16 %v206
    %v243 = vunpack.c.l.b16 %v207
    %v244 = vunpack.c.l.b16 %v208
    %v245 = vpack.c.b16 %v230, %v229
    %v246 = vpack.c.b16 %v232, %v231
    %v247 = vpack.c.b16 %v234, %v233
    %v248 = vpack.c.b16 %v236, %v235
    %v249 = vpack.c.b16 %v238, %v237
    %v250 = vpack.c.b16 %v240, %v239
    %v251 = vpack.c.b16 %v242, %v241
    %v252 = vpack.c.b16 %v244, %v243
    %261 = vmatprep.subr.bf16.mxu0 0
    %262 = vmatpush1.bf16.msra.mxu0 %v245
    %263 = vmatprep.subr.bf16.mxu0 0
    %264 = vmatpush1.bf16.msra.mxu0 %v246
    %265 = vmatprep.subr.bf16.mxu0 0
    %266 = vmatpush1.bf16.msra.mxu0 %v247
    %267 = vmatprep.subr.bf16.mxu0 0
    %268 = vmatpush1.bf16.msra.mxu0 %v248
    %269 = vmatprep.subr.bf16.mxu0 0
    %270 = vmatpush1.bf16.msra.mxu0 %v249
    %271 = vmatprep.subr.bf16.mxu0 0
    %272 = vmatpush1.bf16.msra.mxu0 %v250
    %273 = vmatprep.subr.bf16.mxu0 0
    %274 = vmatpush1.bf16.msra.mxu0 %v251
    %275 = vmatprep.subr.bf16.mxu0 0
    %276 = vmatpush1.bf16.msra.mxu0 %v252
    %277 = vmatprep.subr.bf16.mxu0 0
    %278 = vmatpush1.bf16.msra.mxu0 0
    %279 = vmatprep.subr.bf16.mxu0 0
    %280 = vmatpush1.bf16.msra.mxu0 0
    %281 = vmatprep.subr.bf16.mxu0 0
    %282 = vmatpush1.bf16.msra.mxu0 0
    %283 = vmatprep.subr.bf16.mxu0 0
    %284 = vmatpush1.bf16.msra.mxu0 0
    %285 = vmatprep.subr.bf16.mxu0 0
    %286 = vmatpush1.bf16.msra.mxu0 0
    %287 = vmatprep.subr.bf16.mxu0 0
    %288 = vmatpush1.bf16.msra.mxu0 0
    %289 = vmatprep.subr.bf16.mxu0 0
    %290 = vmatpush1.bf16.msra.mxu0 0
    %291 = vmatprep.subr.bf16.mxu0 0
    %292 = vmatpush1.bf16.msra.mxu0 0
    %293 = vmatprep.mubr.bf16.mxu0 0
    %294 = vmatmul.mubr.bf16.gmra.mrb[0].mxu0 %v191
    %v295 = vpop.f32.mrb[0].mxu0
    %v296 = vadd.f32 %v212, %v295
    %v297 = vpop.f32.mrb[0].mxu0
    %v298 = vpop.f32.mrb[0].mxu0
    %v299 = vpop.f32.mrb[0].mxu0
    %300 = vdwg.mxu0
    %v301 = vmax.f32 %v296, 0.0
    %v302 = vrot.slane %v301, 7
    %v303 = vrot.slane %v301, 1
    %v304 = vsel %vm170, 0.0, %v302
    %v305 = vsel %vm173, 0.0, %v303
    %307 = vrot.lane.b32.xlu0 %v304, 96
    %v308 = vpop.permute.xlu0 %307
    %311 = vrot.lane.b32.xlu0 %v301, 32
    %v312 = vpop.permute.xlu0 %311
    %315 = vrot.lane.b32.xlu0 %v305, 96
    %v316 = vpop.permute.xlu0 %315
    %v318 = vsel %vm187, %v308, %v312
    %v319 = vsel %vm189, %v318, %v316
    %v320 = vpack.c.bf16 %v319, %v319
    %s321 = scalar_lea.vmem [#allocation2], 128
    %v322 = vld [vmem:[%s321] sm:$0xf]
    %v323 = vld [vmem:[%s321 + $0x4] sm:$0xf]
    %v324 = vld [vmem:[%s321 + $0x8] sm:$0xf]
    %v325 = vld [vmem:[%s321 + $0xc] sm:$0xf]
    %v326 = vld [vmem:[%s321 + $0x10] sm:$0xf]
    %v327 = vld [vmem:[%s321 + $0x14] sm:$0xf]
    %v328 = vld [vmem:[%s321 + $0x18] sm:$0xf]
    %v329 = vld [vmem:[%s321 + $0x1c] sm:$0xf]
    %v330 = vld [vmem:[%s321 + $0x20] sm:$0xf]
    %v331 = vld [vmem:[%s321 + $0x24] sm:$0xf]
    %v332 = vld [vmem:[%s321 + $0x28] sm:$0xf]
    %v333 = vld [vmem:[%s321 + $0x2c] sm:$0xf]
    %v334 = vld [vmem:[%s321 + $0x30] sm:$0xf]
    %v335 = vld [vmem:[%s321 + $0x34] sm:$0xf]
    %v336 = vld [vmem:[%s321 + $0x38] sm:$0xf]
    %v337 = vld [vmem:[%s321 + $0x3c] sm:$0xf]
    %v338 = vlaneseq
    %v339 = vshrl.u32 %v338, 7
    %v340 = vsub.s32 1, %v339
    %v341 = vrot.slane %v30, %v340
    %v358 = vunpack.c.l.b16 %v322
    %v359 = vunpack.c.l.b16 %v323
    %v360 = vunpack.c.l.b16 %v324
    %v361 = vunpack.c.l.b16 %v325
    %v362 = vunpack.c.l.b16 %v326
    %v363 = vunpack.c.l.b16 %v327
    %v364 = vunpack.c.l.b16 %v328
    %v365 = vunpack.c.l.b16 %v329
    %v366 = vunpack.c.l.b16 %v330
    %v367 = vunpack.c.l.b16 %v331
    %v368 = vunpack.c.l.b16 %v332
    %v369 = vunpack.c.l.b16 %v333
    %v370 = vunpack.c.l.b16 %v334
    %v371 = vunpack.c.l.b16 %v335
    %v372 = vunpack.c.l.b16 %v336
    %v373 = vunpack.c.l.b16 %v337
    %v374 = vpack.c.b16 %v359, %v358
    %v375 = vpack.c.b16 %v361, %v360
    %v376 = vpack.c.b16 %v363, %v362
    %v377 = vpack.c.b16 %v365, %v364
    %v378 = vpack.c.b16 %v367, %v366
    %v379 = vpack.c.b16 %v369, %v368
    %v380 = vpack.c.b16 %v371, %v370
    %v381 = vpack.c.b16 %v373, %v372
    %390 = vmatprep.subr.bf16.mxu0 0
    %391 = vmatpush1.bf16.msra.mxu0 %v374
    %392 = vmatprep.subr.bf16.mxu0 0
    %393 = vmatpush1.bf16.msra.mxu0 %v375
    %394 = vmatprep.subr.bf16.mxu0 0
    %395 = vmatpush1.bf16.msra.mxu0 %v376
    %396 = vmatprep.subr.bf16.mxu0 0
    %397 = vmatpush1.bf16.msra.mxu0 %v377
    %398 = vmatprep.subr.bf16.mxu0 0
    %399 = vmatpush1.bf16.msra.mxu0 %v378
    %400 = vmatprep.subr.bf16.mxu0 0
    %401 = vmatpush1.bf16.msra.mxu0 %v379
    %402 = vmatprep.subr.bf16.mxu0 0
    %403 = vmatpush1.bf16.msra.mxu0 %v380
    %404 = vmatprep.subr.bf16.mxu0 0
    %405 = vmatpush1.bf16.msra.mxu0 %v381
    %406 = vmatprep.subr.bf16.mxu0 0
    %407 = vmatpush1.bf16.msra.mxu0 0
    %408 = vmatprep.subr.bf16.mxu0 0
    %409 = vmatpush1.bf16.msra.mxu0 0
    %410 = vmatprep.subr.bf16.mxu0 0
    %411 = vmatpush1.bf16.msra.mxu0 0
    %412 = vmatprep.subr.bf16.mxu0 0
    %413 = vmatpush1.bf16.msra.mxu0 0
    %414 = vmatprep.subr.bf16.mxu0 0
    %415 = vmatpush1.bf16.msra.mxu0 0
    %416 = vmatprep.subr.bf16.mxu0 0
    %417 = vmatpush1.bf16.msra.mxu0 0
    %418 = vmatprep.subr.bf16.mxu0 0
    %419 = vmatpush1.bf16.msra.mxu0 0
    %420 = vmatprep.subr.bf16.mxu0 0
    %421 = vmatpush1.bf16.msra.mxu0 0
    %422 = vmatprep.mubr.bf16.mxu0 0
    %423 = vmatmul.mubr.bf16.gmra.mrb[0].mxu0 %v320
    %v424 = vpop.f32.mrb[0].mxu0
    %v425 = vadd.f32 %v341, %v424
    %v426 = vpop.f32.mrb[0].mxu0
    %v427 = vpop.f32.mrb[0].mxu0
    %v428 = vpop.f32.mrb[0].mxu0
    %429 = vdwg.mxu0
    %v430 = vmax.f32 %v425, 0.0
    %v431 = vpack.c.bf16 %v430, %v430
    %s432 = scalar_lea.vmem [#allocation2], 192
    %v433 = vld [vmem:[%s432] sm:$0xf]
    %v434 = vld [vmem:[%s432 + $0x4] sm:$0xf]
    %v435 = vld [vmem:[%s432 + $0x8] sm:$0xf]
    %v436 = vld [vmem:[%s432 + $0xc] sm:$0xf]
    %v437 = vld [vmem:[%s432 + $0x10] sm:$0xf]
    %v438 = vld [vmem:[%s432 + $0x14] sm:$0xf]
    %v439 = vld [vmem:[%s432 + $0x18] sm:$0xf]
    %v440 = vld [vmem:[%s432 + $0x1c] sm:$0xf]
    %v441 = vlaneseq
    %v442 = vshrl.u32 %v441, 7
    %v443 = vsub.s32 2, %v442
    %v444 = vrot.slane %v30, %v443
    %v453 = vunpack.c.l.b16 %v433
    %v454 = vunpack.c.l.b16 %v434
    %v455 = vunpack.c.l.b16 %v435
    %v456 = vunpack.c.l.b16 %v436
    %v457 = vunpack.c.l.b16 %v437
    %v458 = vunpack.c.l.b16 %v438
    %v459 = vunpack.c.l.b16 %v439
    %v460 = vunpack.c.l.b16 %v440
    %v461 = vpack.c.b16 %v454, %v453
    %v462 = vpack.c.b16 %v456, %v455
    %v463 = vpack.c.b16 %v458, %v457
    %v464 = vpack.c.b16 %v460, %v459
    %vm469 = vcmask 523264
    %v471 = vsel %vm469, %v431, 0
    %473 = vmatprep.subr.bf16.mxu0 0
    %474 = vmatpush1.bf16.msra.mxu0 %v461
    %475 = vmatprep.subr.bf16.mxu0 0
    %476 = vmatpush1.bf16.msra.mxu0 %v462
    %477 = vmatprep.subr.bf16.mxu0 0
    %478 = vmatpush1.bf16.msra.mxu0 %v463
    %479 = vmatprep.subr.bf16.mxu0 0
    %480 = vmatpush1.bf16.msra.mxu0 %v464
    %481 = vmatprep.subr.bf16.mxu0 0
    %482 = vmatpush1.bf16.msra.mxu0 0
    %483 = vmatprep.subr.bf16.mxu0 0
    %484 = vmatpush1.bf16.msra.mxu0 0
    %485 = vmatprep.subr.bf16.mxu0 0
    %486 = vmatpush1.bf16.msra.mxu0 0
    %487 = vmatprep.subr.bf16.mxu0 0
    %488 = vmatpush1.bf16.msra.mxu0 0
    %489 = vmatprep.subr.bf16.mxu0 0
    %490 = vmatpush1.bf16.msra.mxu0 0
    %491 = vmatprep.subr.bf16.mxu0 0
    %492 = vmatpush1.bf16.msra.mxu0 0
    %493 = vmatprep.subr.bf16.mxu0 0
    %494 = vmatpush1.bf16.msra.mxu0 0
    %495 = vmatprep.subr.bf16.mxu0 0
    %496 = vmatpush1.bf16.msra.mxu0 0
    %497 = vmatprep.subr.bf16.mxu0 0
    %498 = vmatpush1.bf16.msra.mxu0 0
    %499 = vmatprep.subr.bf16.mxu0 0
    %500 = vmatpush1.bf16.msra.mxu0 0
    %501 = vmatprep.subr.bf16.mxu0 0
    %502 = vmatpush1.bf16.msra.mxu0 0
    %503 = vmatprep.subr.bf16.mxu0 0
    %504 = vmatpush1.bf16.msra.mxu0 0
    %505 = vmatprep.mubr.bf16.mxu0 0
    %506 = vmatmul.mubr.bf16.gmra.mrb[0].mxu0 %v471
    %v507 = vpop.f32.mrb[0].mxu0
    %v508 = vadd.f32 %v444, %v507
    %v509 = vpop.f32.mrb[0].mxu0
    %v510 = vpop.f32.mrb[0].mxu0
    %v511 = vpop.f32.mrb[0].mxu0
    %512 = vdwg.mxu0
    %v513 = vadd.f32 %v296, %v508
    %v514 = vrot.slane %v513, 7
    %v515 = vrot.slane %v513, 1
    %v516 = vsel %vm170, 0.0, %v514
    %v517 = vsel %vm173, 0.0, %v515
    %519 = vrot.lane.b32.xlu0 %v516, 96
    %v520 = vpop.permute.xlu0 %519
    %523 = vrot.lane.b32.xlu0 %v513, 32
    %v524 = vpop.permute.xlu0 %523
    %527 = vrot.lane.b32.xlu0 %v517, 96
    %v528 = vpop.permute.xlu0 %527
    %v530 = vsel %vm187, %v520, %v524
    %v531 = vsel %vm189, %v530, %v528
    %v532 = vpack.c.bf16 %v531, %v531
    %s533 = scalar_lea.vmem [#allocation2], 256
    %v534 = vld [vmem:[%s533] sm:$0xf]
    %v535 = vld [vmem:[%s533 + $0x4] sm:$0xf]
    %v536 = vld [vmem:[%s533 + $0x8] sm:$0xf]
    %v537 = vld [vmem:[%s533 + $0xc] sm:$0xf]
    %v538 = vld [vmem:[%s533 + $0x10] sm:$0xf]
    %v539 = vld [vmem:[%s533 + $0x14] sm:$0xf]
    %v540 = vld [vmem:[%s533 + $0x18] sm:$0xf]
    %v541 = vld [vmem:[%s533 + $0x1c] sm:$0xf]
    %v542 = vld [vmem:[%s533 + $0x20] sm:$0xf]
    %v543 = vld [vmem:[%s533 + $0x24] sm:$0xf]
    %v544 = vld [vmem:[%s533 + $0x28] sm:$0xf]
    %v545 = vld [vmem:[%s533 + $0x2c] sm:$0xf]
    %v546 = vld [vmem:[%s533 + $0x30] sm:$0xf]
    %v547 = vld [vmem:[%s533 + $0x34] sm:$0xf]
    %v548 = vld [vmem:[%s533 + $0x38] sm:$0xf]
    %v549 = vld [vmem:[%s533 + $0x3c] sm:$0xf]
    %v550 = vlaneseq
    %v551 = vshrl.u32 %v550, 7
    %v552 = vsub.s32 3, %v551
    %v553 = vrot.slane %v30, %v552
    %v570 = vunpack.c.l.b16 %v534
    %v571 = vunpack.c.l.b16 %v535
    %v572 = vunpack.c.l.b16 %v536
    %v573 = vunpack.c.l.b16 %v537
    %v574 = vunpack.c.l.b16 %v538
    %v575 = vunpack.c.l.b16 %v539
    %v576 = vunpack.c.l.b16 %v540
    %v577 = vunpack.c.l.b16 %v541
    %v578 = vunpack.c.l.b16 %v542
    %v579 = vunpack.c.l.b16 %v543
    %v580 = vunpack.c.l.b16 %v544
    %v581 = vunpack.c.l.b16 %v545
    %v582 = vunpack.c.l.b16 %v546
    %v583 = vunpack.c.l.b16 %v547
    %v584 = vunpack.c.l.b16 %v548
    %v585 = vunpack.c.l.b16 %v549
    %v586 = vpack.c.b16 %v571, %v570
    %v587 = vpack.c.b16 %v573, %v572
    %v588 = vpack.c.b16 %v575, %v574
    %v589 = vpack.c.b16 %v577, %v576
    %v590 = vpack.c.b16 %v579, %v578
    %v591 = vpack.c.b16 %v581, %v580
    %v592 = vpack.c.b16 %v583, %v582
    %v593 = vpack.c.b16 %v585, %v584
    %602 = vmatprep.subr.bf16.mxu0 0
    %603 = vmatpush1.bf16.msra.mxu0 %v586
    %604 = vmatprep.subr.bf16.mxu0 0
    %605 = vmatpush1.bf16.msra.mxu0 %v587
    %606 = vmatprep.subr.bf16.mxu0 0
    %607 = vmatpush1.bf16.msra.mxu0 %v588
    %608 = vmatprep.subr.bf16.mxu0 0
    %609 = vmatpush1.bf16.msra.mxu0 %v589
    %610 = vmatprep.subr.bf16.mxu0 0
    %611 = vmatpush1.bf16.msra.mxu0 %v590
    %612 = vmatprep.subr.bf16.mxu0 0
    %613 = vmatpush1.bf16.msra.mxu0 %v591
    %614 = vmatprep.subr.bf16.mxu0 0
    %615 = vmatpush1.bf16.msra.mxu0 %v592
    %616 = vmatprep.subr.bf16.mxu0 0
    %617 = vmatpush1.bf16.msra.mxu0 %v593
    %618 = vmatprep.subr.bf16.mxu0 0
    %619 = vmatpush1.bf16.msra.mxu0 0
    %620 = vmatprep.subr.bf16.mxu0 0
    %621 = vmatpush1.bf16.msra.mxu0 0
    %622 = vmatprep.subr.bf16.mxu0 0
    %623 = vmatpush1.bf16.msra.mxu0 0
    %624 = vmatprep.subr.bf16.mxu0 0
    %625 = vmatpush1.bf16.msra.mxu0 0
    %626 = vmatprep.subr.bf16.mxu0 0
    %627 = vmatpush1.bf16.msra.mxu0 0
    %628 = vmatprep.subr.bf16.mxu0 0
    %629 = vmatpush1.bf16.msra.mxu0 0
    %630 = vmatprep.subr.bf16.mxu0 0
    %631 = vmatpush1.bf16.msra.mxu0 0
    %632 = vmatprep.subr.bf16.mxu0 0
    %633 = vmatpush1.bf16.msra.mxu0 0
    %634 = vmatprep.mubr.bf16.mxu0 0
    %635 = vmatmul.mubr.bf16.gmra.mrb[0].mxu0 %v532
    %v636 = vpop.f32.mrb[0].mxu0
    %v637 = vadd.f32 %v553, %v636
    %v638 = vpop.f32.mrb[0].mxu0
    %v639 = vpop.f32.mrb[0].mxu0
    %v640 = vpop.f32.mrb[0].mxu0
    %641 = vdwg.mxu0
    %643 = vrot.lane.b32.xlu0 %v637, 96
    %v644 = vpop.permute.xlu0 %643
    %646 = vrot.lane.b32.xlu0 %v637, 64
    %v647 = vpop.permute.xlu0 %646
    %649 = vrot.lane.b32.xlu0 %v637, 32
    %v650 = vpop.permute.xlu0 %649
    %v652 = vsel %vm187, %v637, 0.0
    %653 = vadd.xlane.f32.xlu0 %v652
    %v654 = vpop.xlane.xlu0 %653
    %v655 = vsel %vm187, %v644, 0.0
    %656 = vadd.xlane.f32.xlu0 %v655
    %v657 = vpop.xlane.xlu0 %656
    %v658 = vsel %vm187, %v647, 0.0
    %659 = vadd.xlane.f32.xlu0 %v658
    %v660 = vpop.xlane.xlu0 %659
    %v661 = vsel %vm187, %v650, 0.0
    %662 = vadd.xlane.f32.xlu0 %v661
    %v663 = vpop.xlane.xlu0 %662
    %v664 = vrcp.pop 32.0
    %v665 = vmul.f32 %v654, %v664
    %v666 = vmul.f32 %v657, %v664
    %v667 = vmul.f32 %v660, %v664
    %v668 = vmul.f32 %v663, %v664
    %v669 = vsub.f32 %v637, %v665
    %v670 = vsub.f32 %v644, %v666
    %v671 = vsub.f32 %v647, %v667
    %v672 = vsub.f32 %v650, %v668
    %v673 = vmul.f32 %v669, %v669
    %v674 = vmul.f32 %v670, %v670
    %v675 = vmul.f32 %v671, %v671
    %v676 = vmul.f32 %v672, %v672
    %v677 = vsel %vm187, %v673, 0.0
    %678 = vadd.xlane.f32.xlu0 %v677
    %v679 = vpop.xlane.xlu0 %678
    %v680 = vsel %vm187, %v674, 0.0
    %681 = vadd.xlane.f32.xlu0 %v680
    %v682 = vpop.xlane.xlu0 %681
    %v683 = vsel %vm187, %v675, 0.0
    %684 = vadd.xlane.f32.xlu0 %v683
    %v685 = vpop.xlane.xlu0 %684
    %v686 = vsel %vm187, %v676, 0.0
    %687 = vadd.xlane.f32.xlu0 %v686
    %v688 = vpop.xlane.xlu0 %687
    %v689 = vmul.f32 %v679, %v664
    %v690 = vmul.f32 %v682, %v664
    %v691 = vmul.f32 %v685, %v664
    %v692 = vmul.f32 %v688, %v664
    %v693 = vadd.f32 %v689, 1e-05
    %v694 = vadd.f32 %v690, 1e-05
    %v695 = vadd.f32 %v691, 1e-05
    %v696 = vadd.f32 %v692, 1e-05
    %v697 = vrsqrt.pop %v693
    %v698 = vrsqrt.pop %v694
    %v699 = vrsqrt.pop %v695
    %v700 = vrsqrt.pop %v696
    %v701 = vmul.f32 %v669, %v697
    %v702 = vmul.f32 %v670, %v698
    %v703 = vmul.f32 %v671, %v699
    %v704 = vmul.f32 %v672, %v700
    %v705 = vlaneseq
    %v706 = vshrl.u32 %v705, 7
    %v707 = vsub.s32 4, %v706
    %v708 = vrot.slane %v30, %v707
    %v709 = vmul.f32 %v701, %v708
    %v710 = vmul.f32 %v702, %v708
    %v711 = vmul.f32 %v703, %v708
    %v712 = vmul.f32 %v704, %v708
    %v713 = vlaneseq
    %v714 = vshrl.u32 %v713, 7
    %v715 = vsub.s32 5, %v714
    %v716 = vrot.slane %v30, %v715
    %v717 = vadd.f32 %v709, %v716
    %v718 = vadd.f32 %v710, %v716
    %v719 = vadd.f32 %v711, %v716
    %v720 = vadd.f32 %v712, %v716
    %722 = vrot.lane.b32.xlu0 %v718, 32
    %v723 = vpop.permute.xlu0 %722
    %726 = vrot.lane.b32.xlu0 %v719, 64
    %v727 = vpop.permute.xlu0 %726
    %730 = vrot.lane.b32.xlu0 %v720, 96
    %v731 = vpop.permute.xlu0 %730
    %v733 = vsel %vm187, %v717, %v723
    %v734 = vsel %vm469, %v733, %v727
    %v735 = vsel %vm189, %v734, %v731
    %736 = vst [vmem:[#allocation5] sm:$0xff] %v735
    // Predicated region
    $region18: #{tpu_custom_call.1} parent=1 // pred_check
      _
    $region19: #{tpu_custom_call.1} parent=1 // pred_check_branch
      %738 = sbr.rel (0) target = $region21
    $region20: #{tpu_custom_call.1} parent=1 // pred_region
      %s740 = ssub.s32 128, 128
      %741 = vsyncadd [#allocation4], %s740
      %s743 = sshll.u32 [#allocation5], 4
      %s744 = int_to_ptr.vmem [resolvable:$true] %s743
      %746 = dma.vmem_to_hbm [thread:$0]  %s744, 128, %s3, [#allocation4]
    $region21: #{tpu_custom_call.1} parent=1 // pred_fallthru
      _
    // Predicated region
    $region22: #{tpu_custom_call.1} parent=1 // pred_check
      _
    $region23: #{tpu_custom_call.1} parent=1 // pred_check_branch
      %748 = sbr.rel (0) target = $region25
    $region24: #{tpu_custom_call.1} parent=1 // pred_region
      %749 = dma.done [#allocation4], 128
    $region25: #{tpu_custom_call.1} parent=1 // pred_fallthru
      _
    %750 = vsyncpa [#allocation3], 1
    %751 = vsyncpa [#allocation4], 1

</llo_original>
